<compile_context>
chip_gen: v7x
topology: tpu7x:2x2x1
jax: 0.10.0
libtpu: 0.0.40
codegen_flags: <defaults>
</compile_context>

<pallas_src>
from functools import partial

import jax
import jax.numpy as jnp
from jax.experimental import pallas as pl
from jax.experimental.pallas import tpu as pltpu


def _round_up(n: int, m: int) -> int:
    return ((n + m - 1) // m) * m


def _choose_tile_b(B: int, requested: int) -> int:
    """Pick a batch tile: multiple of 8, >=2 even grid steps for big batches."""
    if B <= 8:
        return B                     # single block == full batch dim (exempt)
    B8 = _round_up(B, 8)
    t = min(_round_up(max(requested, 8), 8), B8)
    steps = pl.cdiv(B8, t)
    if steps == 1:
        if B8 < 256:                 # tiny problem: launch-bound, one grid step
            return B
        steps = 2                    # give v7x's two TensorCores work to shard
    if steps % 2:
        steps += 1                   # even step count balances the two cores
    return _round_up(pl.cdiv(B8, steps), 8)


def _resident_spec(shape):
    """Constant-index-map (VMEM-resident) block; single-buffered when supported."""
    buffered = getattr(pl, "Buffered", None)
    if buffered is not None:
        try:
            return pl.BlockSpec(shape, lambda i: (0, 0),
                                pipeline_mode=buffered(1))
        except TypeError:            # older jax without pipeline_mode kwarg
            pass
    return pl.BlockSpec(shape, lambda i: (0, 0))


def _mlp_kernel(x_ref, w1_ref, b1_ref, w2_ref, b2_ref, o_ref):
    # One (tile_b, V) batch tile per grid step; weights/biases are VMEM-resident.
    h = jnp.dot(x_ref[...], w1_ref[...], preferred_element_type=jnp.float32)
    h = jnp.maximum(h + b1_ref[...], 0.0)                 # relu (f32 tail, v5e-safe)
    y = jnp.dot(h.astype(w2_ref.dtype), w2_ref[...],
                preferred_element_type=jnp.float32) + b2_ref[...]
    # sigmoid(y) - 0.5 == 0.5 * tanh(0.5 * y)  (exact identity, single EUP op)
    o_ref[...] = (0.5 * jnp.tanh(0.5 * y)).astype(o_ref.dtype)


@partial(jax.jit, static_argnames=("tile_b", "compute_dtype"))
def random_constraints_mlp(x, w1, b1, w2, b2, *, tile_b=1024,
                           compute_dtype=jnp.float32):
    """Fused Pallas forward of RandomConstraintsMLP.

    x : [B, V]   (any float dtype; cast like x.float() in torch)
    w1: [V, H], b1: [H]     (fc1.weight.T, fc1.bias)
    w2: [H, V], b2: [V]     (fc2.weight.T, fc2.bias)
    returns [B, V] float32 in [-0.5, 0.5]

    compute_dtype=jnp.bfloat16 halves the streaming HBM bytes and uses the bf16
    MXU natively (accumulation stays f32); numerics deviate slightly from the
    PyTorch x.float() path, so f32 remains the default.
    """
    B, V = x.shape
    Vw, H = w1.shape
    assert Vw == V and w2.shape == (H, V) and b1.shape == (H,) and b2.shape == (V,)

    tb = _choose_tile_b(B, tile_b)
    grid = (pl.cdiv(B, tb),)         # last block may be partial; rows are independent

    # Single cast (x.float() semantics when compute_dtype == f32). Biases stay f32.
    xc = x.astype(compute_dtype)
    w1c = w1.astype(compute_dtype)
    w2c = w2.astype(compute_dtype)
    b1r = b1.astype(jnp.float32).reshape(1, H)
    b2r = b2.astype(jnp.float32).reshape(1, V)

    # VMEM budget: double-buffered x/out streaming tiles + single-buffered resident
    # weights/biases + activation temporaries, capped by the physical per-core VMEM.
    in_bytes = jnp.dtype(compute_dtype).itemsize
    needed = (
        2 * tb * V * (in_bytes + 4)                    # x tile (2-buf) + f32 out tile (2-buf)
        + (V * H + H * V) * in_bytes + (H + V) * 4     # resident weights + biases
        + 2 * tb * (H + V) * 4                         # h / y temporaries headroom
    )
    try:
        phys_vmem = int(pltpu.get_tpu_info().vmem_capacity_bytes)
    except Exception:
        phys_vmem = 128 << 20
    cap = min(100 << 20, (phys_vmem * 3) // 4)         # ~48 MiB on v7x, ~96-100 MiB else
    vmem_limit = int(min(max(needed + (4 << 20), 32 << 20), cap))

    out = pl.pallas_call(
        _mlp_kernel,
        out_shape=jax.ShapeDtypeStruct((B, V), jnp.float32),
        grid=grid,
        in_specs=[
            pl.BlockSpec((tb, V), lambda i: (i, 0)),   # x: new batch tile per step
            _resident_spec((V, H)),                    # w1: resident, single-buffered
            _resident_spec((1, H)),                    # b1
            _resident_spec((H, V)),                    # w2
            _resident_spec((1, V)),                    # b2
        ],
        out_specs=pl.BlockSpec((tb, V), lambda i: (i, 0)),
        compiler_params=pltpu.CompilerParams(
            dimension_semantics=("parallel",),         # megacore-shardable on v7x
            vmem_limit_bytes=vmem_limit,
        ),
    )(xc, w1c, b1r, w2c, b2r)

    return out


def init_params(key, num_variables, hidden_layer_size):
    """torch.nn.Linear-style init (U[-1/sqrt(fan_in), 1/sqrt(fan_in)])."""
    k1, k2, k3, k4 = jax.random.split(key, 4)
    bound1 = 1.0 / jnp.sqrt(num_variables)
    bound2 = 1.0 / jnp.sqrt(hidden_layer_size)
    w1 = jax.random.uniform(k1, (num_variables, hidden_layer_size),
                            jnp.float32, -bound1, bound1)   # fc1.weight.T
    b1 = jax.random.uniform(k2, (hidden_layer_size,), jnp.float32, -bound1, bound1)
    w2 = jax.random.uniform(k3, (hidden_layer_size, num_variables),
                            jnp.float32, -bound2, bound2)   # fc2.weight.T
    b2 = jax.random.uniform(k4, (num_variables,), jnp.float32, -bound2, bound2)
    return w1, b1, w2, b2


def _reference(x, w1, b1, w2, b2):
    h = jnp.maximum(x.astype(jnp.float32) @ w1 + b1, 0.0)
    return jax.nn.sigmoid(h @ w2 + b2) - 0.5


if __name__ == "__main__":
    key = jax.random.PRNGKey(0)
    kx, kp, kx2 = jax.random.split(key, 3)

    # Small shapes implied by the module: batch=8, num_variables=16, hidden=32.
    batch, num_variables, hidden_layer_size = 8, 16, 32
    x = jax.random.normal(kx, (batch, num_variables), jnp.float32)
    w1, b1, w2, b2 = init_params(kp, num_variables, hidden_layer_size)

    y = random_constraints_mlp(x, w1, b1, w2, b2)
    jax.block_until_ready(y)
    y_ref = _reference(x, w1, b1, w2, b2)
    assert y.shape == (batch, num_variables)
    assert jnp.allclose(y, y_ref, atol=1e-4), "mismatch vs reference (small batch)"

    # Tiled path: B not a multiple of the tile, >= 2 grid steps, partial tail block.
    big_batch = 1000
    xb = jax.random.normal(kx2, (big_batch, num_variables), jnp.float32)
    yb = random_constraints_mlp(xb, w1, b1, w2, b2)
    jax.block_until_ready(yb)
    yb_ref = _reference(xb, w1, b1, w2, b2)
    assert yb.shape == (big_batch, num_variables)
    assert jnp.allclose(yb, yb_ref, atol=1e-4), "mismatch vs reference (tiled batch)"

    # Optional bf16-operand path (f32 accumulate): looser tolerance, halves HBM bytes.
    yb16 = random_constraints_mlp(xb, w1, b1, w2, b2, compute_dtype=jnp.bfloat16)
    jax.block_until_ready(yb16)
    assert jnp.allclose(yb16, yb_ref, atol=3e-2), "mismatch vs reference (bf16 path)"

    print("KERNEL_OK")
</pallas_src>

<mosaic_0001>
module attributes {stable_mosaic.version = 11 : i64} {
  func.func @_mlp_kernel(%arg0: i32, %arg1: memref<8x16xf32, #tpu.memory_space<vmem>>, %arg2: memref<16x32xf32, #tpu.memory_space<vmem>>, %arg3: memref<1x32xf32, #tpu.memory_space<vmem>>, %arg4: memref<32x16xf32, #tpu.memory_space<vmem>>, %arg5: memref<1x16xf32, #tpu.memory_space<vmem>>, %arg6: memref<8x16xf32, #tpu.memory_space<vmem>>) attributes {dimension_semantics = [#tpu.dimension_semantics<parallel>], iteration_bounds = array<i64: 1>, scalar_prefetch = 0 : i64, scratch_operands = 0 : i64, tpu.core_type = #tpu.core_type<tc>, window_params = [{transform_indices = @transform_0, window_bounds = array<i64: 8, 16>}, {pipeline_mode = #tpu.pipeline_mode<synchronous>, transform_indices = @transform_1, window_bounds = array<i64: 16, 32>}, {pipeline_mode = #tpu.pipeline_mode<synchronous>, transform_indices = @transform_2, window_bounds = array<i64: 1, 32>}, {pipeline_mode = #tpu.pipeline_mode<synchronous>, transform_indices = @transform_3, window_bounds = array<i64: 32, 16>}, {pipeline_mode = #tpu.pipeline_mode<synchronous>, transform_indices = @transform_4, window_bounds = array<i64: 1, 16>}, {transform_indices = @transform_5, window_bounds = array<i64: 8, 16>}]} {
    %c0 = arith.constant 0 : index
    %c0_0 = arith.constant 0 : index
    %0 = vector.load %arg1[%c0, %c0_0] : memref<8x16xf32, #tpu.memory_space<vmem>>, vector<8x16xf32>
    %c0_1 = arith.constant 0 : index
    %c0_2 = arith.constant 0 : index
    %1 = vector.load %arg2[%c0_1, %c0_2] : memref<16x32xf32, #tpu.memory_space<vmem>>, vector<16x32xf32>
    %cst = arith.constant dense<0.000000e+00> : vector<8x32xf32>
    %2 = tpu.matmul %0, %1, %cst {dimension_numbers = #tpu.dot_dimension_numbers<[1], [0], [0], [1], [0, 0, 1, 1], [], []>} : vector<8x16xf32>, vector<16x32xf32>, vector<8x32xf32> -> vector<8x32xf32>
    %c0_3 = arith.constant 0 : index
    %c0_4 = arith.constant 0 : index
    %3 = vector.load %arg3[%c0_3, %c0_4] : memref<1x32xf32, #tpu.memory_space<vmem>>, vector<1x32xf32>
    %4 = vector.broadcast %3 : vector<1x32xf32> to vector<8x32xf32>
    %5 = arith.addf %2, %4 : vector<8x32xf32>
    %cst_5 = arith.constant 0.000000e+00 : f32
    %6 = vector.broadcast %cst_5 : f32 to vector<8x32xf32>
    %7 = arith.maximumf %5, %6 : vector<8x32xf32>
    %c0_6 = arith.constant 0 : index
    %c0_7 = arith.constant 0 : index
    %8 = vector.load %arg4[%c0_6, %c0_7] : memref<32x16xf32, #tpu.memory_space<vmem>>, vector<32x16xf32>
    %cst_8 = arith.constant dense<0.000000e+00> : vector<8x16xf32>
    %9 = tpu.matmul %7, %8, %cst_8 {dimension_numbers = #tpu.dot_dimension_numbers<[1], [0], [0], [1], [0, 0, 1, 1], [], []>} : vector<8x32xf32>, vector<32x16xf32>, vector<8x16xf32> -> vector<8x16xf32>
    %c0_9 = arith.constant 0 : index
    %c0_10 = arith.constant 0 : index
    %10 = vector.load %arg5[%c0_9, %c0_10] : memref<1x16xf32, #tpu.memory_space<vmem>>, vector<1x16xf32>
    %11 = vector.broadcast %10 : vector<1x16xf32> to vector<8x16xf32>
    %12 = arith.addf %9, %11 : vector<8x16xf32>
    %cst_11 = arith.constant 5.000000e-01 : f32
    %13 = vector.broadcast %cst_11 : f32 to vector<8x16xf32>
    %14 = arith.mulf %13, %12 : vector<8x16xf32>
    %15 = math.tanh %14 : vector<8x16xf32>
    %cst_12 = arith.constant 5.000000e-01 : f32
    %16 = vector.broadcast %cst_12 : f32 to vector<8x16xf32>
    %17 = arith.mulf %16, %15 : vector<8x16xf32>
    %c0_13 = arith.constant 0 : index
    %c0_14 = arith.constant 0 : index
    %18 = vector.load %arg6[%c0_13, %c0_14] : memref<8x16xf32, #tpu.memory_space<vmem>>, vector<8x16xf32>
    tpu.vector_store %arg6[%c0_13, %c0_14], %17 {strides = array<i32>} : memref<8x16xf32, #tpu.memory_space<vmem>>, vector<8x16xf32>,
    return
  }
  func.func @transform_0(%arg0: i32) -> (i32, i32) {
    %c0_i32 = arith.constant 0 : i32
    %c0_i32_0 = arith.constant 0 : i32
    return %arg0, %c0_i32 : i32, i32
  }
  func.func @transform_1(%arg0: i32) -> (i32, i32) {
    %c0_i32 = arith.constant 0 : i32
    %c0_i32_0 = arith.constant 0 : i32
    %c0_i32_1 = arith.constant 0 : i32
    return %c0_i32, %c0_i32_0 : i32, i32
  }
  func.func @transform_2(%arg0: i32) -> (i32, i32) {
    %c0_i32 = arith.constant 0 : i32
    %c0_i32_0 = arith.constant 0 : i32
    %c0_i32_1 = arith.constant 0 : i32
    return %c0_i32, %c0_i32_0 : i32, i32
  }
  func.func @transform_3(%arg0: i32) -> (i32, i32) {
    %c0_i32 = arith.constant 0 : i32
    %c0_i32_0 = arith.constant 0 : i32
    %c0_i32_1 = arith.constant 0 : i32
    return %c0_i32, %c0_i32_0 : i32, i32
  }
  func.func @transform_4(%arg0: i32) -> (i32, i32) {
    %c0_i32 = arith.constant 0 : i32
    %c0_i32_0 = arith.constant 0 : i32
    %c0_i32_1 = arith.constant 0 : i32
    return %c0_i32, %c0_i32_0 : i32, i32
  }
  func.func @transform_5(%arg0: i32) -> (i32, i32) {
    %c0_i32 = arith.constant 0 : i32
    %c0_i32_0 = arith.constant 0 : i32
    return %arg0, %c0_i32 : i32, i32
  }
}

</mosaic_0001>

<llo_original>
// kernel: random_constraints_mlp.1
$region0: #{random_constraints_mlp.1}
  #allocation0 [shape = 'u32[]', space=smem, size = 0x4, offset = 0x4, fixed_abs, tag = 'smem constant byte address 0x4 - core index']
  #allocation1 [shape = 'u32[144,128]{1,0:T(1,128)}', space=vmem, size = 0x12000, scoped, tag = 'internal scratch']
  %s0 = inlined_call_operand.vmem [shape: f32[8,16], index: 0, kind: input, shape index: {}]
  %s1 = inlined_call_operand.vmem [shape: f32[16,32], index: 1, kind: input, shape index: {}]
  %s2 = inlined_call_operand.vmem [shape: f32[1,32], index: 2, kind: input, shape index: {}]
  %s3 = inlined_call_operand.vmem [shape: f32[32,16], index: 3, kind: input, shape index: {}]
  %s4 = inlined_call_operand.vmem [shape: f32[1,16], index: 4, kind: input, shape index: {}]
  %s5 = inlined_call_operand.hbm [shape: f32[8,16], index: 5, kind: output, shape index: {}]
  %s6 = sld [smem:[#allocation0]]
  $region30: #{random_constraints_mlp.1} parent=0
    _
  %s8 = ssub.s32 1, %s6
  %s9 = scalar_select 0, %s8, %s6
  $region1: #{random_constraints_mlp.1} parent=0
    #allocation2 [shape = 'u8[4096]{0}', space=vmem, size = 0x1000, scoped, tag = 'output window, operand 0, single buffered']
    #allocation3 [shape = 's32[1]{0}', space=sflag, size = 0x4, scoped, tag = 'scoped memory for random_constraints_mlp.1']
    %10 = vsyncpa [#allocation3], 0
    // Predicated region
    $region2: #{random_constraints_mlp.1} parent=1 // pred_check
      _
    $region3: #{random_constraints_mlp.1} parent=1 // pred_check_branch
      %12 = sbr.rel (0) target = $region5
    $region4: #{random_constraints_mlp.1} parent=1 // pred_region
      _
    $region5: #{random_constraints_mlp.1} parent=1 // pred_fallthru
      _
    // Predicated region
    $region6: #{random_constraints_mlp.1} parent=1 // pred_check
      _
    $region7: #{random_constraints_mlp.1} parent=1 // pred_check_branch
      %14 = sbr.rel (0) target = $region9
    $region8: #{random_constraints_mlp.1} parent=1 // pred_region
      _
    $region9: #{random_constraints_mlp.1} parent=1 // pred_fallthru
      _
    // Predicated region
    $region10: #{random_constraints_mlp.1} parent=1 // pred_check
      _
    $region11: #{random_constraints_mlp.1} parent=1 // pred_check_branch
      %16 = sbr.rel (0) target = $region13
    $region12: #{random_constraints_mlp.1} parent=1 // pred_region
      _
    $region13: #{random_constraints_mlp.1} parent=1 // pred_fallthru
      _
    // Predicated region
    $region14: #{random_constraints_mlp.1} parent=1 // pred_check
      _
    $region15: #{random_constraints_mlp.1} parent=1 // pred_check_branch
      %18 = sbr.rel (0) target = $region17
    $region16: #{random_constraints_mlp.1} parent=1 // pred_region
      _
    $region17: #{random_constraints_mlp.1} parent=1 // pred_fallthru
      _
    // Predicated region
    $region18: #{random_constraints_mlp.1} parent=1 // pred_check
      _
    $region19: #{random_constraints_mlp.1} parent=1 // pred_check_branch
      %20 = sbr.rel (0) target = $region21
    $region20: #{random_constraints_mlp.1} parent=1 // pred_region
      _
    $region21: #{random_constraints_mlp.1} parent=1 // pred_fallthru
      _
    %v21 = vld [vmem:[%s0] sm:$0xff]
    %v22 = vld [vmem:[%s1] sm:$0xff]
    %v23 = vld [vmem:[%s1 + $0x8] sm:$0xff]
    %v24 = vld [vmem:[%s2] sm:$0x1]
    %v26 = vlaneseq
    %v27 = vshrl.u32 %v26, 7
    %v28 = vsub.s32 0, %v27
    %v29 = vrot.slane %v24, %v28
    %vm31 = vcmask 130048
    %v33 = vsel %vm31, %v21, 0
    %35 = vmatprep.subr.mxu0 0.0
    %36 = vmatpush1.msra.mxu0 %v22
    %37 = vmatprep.subr.mxu0 0.0
    %38 = vmatpush1.msra.mxu0 %v23
    %39 = vmatprep.subr.mxu0 0.0
    %40 = vmatpush1.msra.mxu0 0.0
    %41 = vmatprep.subr.mxu0 0.0
    %42 = vmatpush1.msra.mxu0 0.0
    %43 = vmatprep.subr.mxu0 0.0
    %44 = vmatpush1.msra.mxu0 0.0
    %45 = vmatprep.subr.mxu0 0.0
    %46 = vmatpush1.msra.mxu0 0.0
    %47 = vmatprep.subr.mxu0 0.0
    %48 = vmatpush1.msra.mxu0 0.0
    %49 = vmatprep.subr.mxu0 0.0
    %50 = vmatpush1.msra.mxu0 0.0
    %51 = vmatprep.subr.mxu0 0.0
    %52 = vmatpush1.msra.mxu0 0.0
    %53 = vmatprep.subr.mxu0 0.0
    %54 = vmatpush1.msra.mxu0 0.0
    %55 = vmatprep.subr.mxu0 0.0
    %56 = vmatpush1.msra.mxu0 0.0
    %57 = vmatprep.subr.mxu0 0.0
    %58 = vmatpush1.msra.mxu0 0.0
    %59 = vmatprep.subr.mxu0 0.0
    %60 = vmatpush1.msra.mxu0 0.0
    %61 = vmatprep.subr.mxu0 0.0
    %62 = vmatpush1.msra.mxu0 0.0
    %63 = vmatprep.subr.mxu0 0.0
    %64 = vmatpush1.msra.mxu0 0.0
    %65 = vmatprep.subr.mxu0 0.0
    %66 = vmatpush1.msra.mxu0 0.0
    %67 = vmatprep.subr.mxu0 0.0
    %68 = vmatpush1.msra.mxu0 0.0
    %69 = vmatprep.subr.mxu0 0.0
    %70 = vmatpush1.msra.mxu0 0.0
    %71 = vmatprep.subr.mxu0 0.0
    %72 = vmatpush1.msra.mxu0 0.0
    %73 = vmatprep.subr.mxu0 0.0
    %74 = vmatpush1.msra.mxu0 0.0
    %75 = vmatprep.subr.mxu0 0.0
    %76 = vmatpush1.msra.mxu0 0.0
    %77 = vmatprep.subr.mxu0 0.0
    %78 = vmatpush1.msra.mxu0 0.0
    %79 = vmatprep.subr.mxu0 0.0
    %80 = vmatpush1.msra.mxu0 0.0
    %81 = vmatprep.subr.mxu0 0.0
    %82 = vmatpush1.msra.mxu0 0.0
    %83 = vmatprep.subr.mxu0 0.0
    %84 = vmatpush1.msra.mxu0 0.0
    %85 = vmatprep.subr.mxu0 0.0
    %86 = vmatpush1.msra.mxu0 0.0
    %87 = vmatprep.subr.mxu0 0.0
    %88 = vmatpush1.msra.mxu0 0.0
    %89 = vmatprep.subr.mxu0 0.0
    %90 = vmatpush1.msra.mxu0 0.0
    %91 = vmatprep.subr.mxu0 0.0
    %92 = vmatpush1.msra.mxu0 0.0
    %93 = vmatprep.subr.mxu0 0.0
    %94 = vmatpush1.msra.mxu0 0.0
    %95 = vmatprep.subr.mxu0 0.0
    %96 = vmatpush1.msra.mxu0 0.0
    %97 = vmatprep.subr.mxu0 0.0
    %98 = vmatpush1.msra.mxu0 0.0
    %99 = vmatprep.mubr.f32.mxu0 0.0
    %100 = vmatmul.mubr.f32.gmra.mrb[0].mxu0 %v33
    %v101 = vpop.f32.mrb[0].mxu0
    %v102 = vadd.f32 %v29, %v101
    %v103 = vpop.f32.mrb[0].mxu0
    %104 = vdwg.mxu0
    %v105 = vmax.f32 %v102, 0.0
    %v106 = vld [vmem:[%s3] sm:$0xff]
    %v107 = vld [vmem:[%s3 + $0x8] sm:$0xff]
    %v108 = vld [vmem:[%s3 + $0x10] sm:$0xff]
    %v109 = vld [vmem:[%s3 + $0x18] sm:$0xff]
    %v110 = vld [vmem:[%s4] sm:$0x1]
    %v112 = vlaneseq
    %v113 = vshrl.u32 %v112, 7
    %v114 = vsub.s32 0, %v113
    %v115 = vrot.slane %v110, %v114
    %vm117 = vcmask 261120
    %v119 = vsel %vm117, %v105, 0
    %121 = vmatprep.subr.mxu0 0.0
    %122 = vmatpush1.msra.mxu0 %v106
    %123 = vmatprep.subr.mxu0 0.0
    %124 = vmatpush1.msra.mxu0 %v107
    %125 = vmatprep.subr.mxu0 0.0
    %126 = vmatpush1.msra.mxu0 %v108
    %127 = vmatprep.subr.mxu0 0.0
    %128 = vmatpush1.msra.mxu0 %v109
    %129 = vmatprep.subr.mxu0 0.0
    %130 = vmatpush1.msra.mxu0 0.0
    %131 = vmatprep.subr.mxu0 0.0
    %132 = vmatpush1.msra.mxu0 0.0
    %133 = vmatprep.subr.mxu0 0.0
    %134 = vmatpush1.msra.mxu0 0.0
    %135 = vmatprep.subr.mxu0 0.0
    %136 = vmatpush1.msra.mxu0 0.0
    %137 = vmatprep.subr.mxu0 0.0
    %138 = vmatpush1.msra.mxu0 0.0
    %139 = vmatprep.subr.mxu0 0.0
    %140 = vmatpush1.msra.mxu0 0.0
    %141 = vmatprep.subr.mxu0 0.0
    %142 = vmatpush1.msra.mxu0 0.0
    %143 = vmatprep.subr.mxu0 0.0
    %144 = vmatpush1.msra.mxu0 0.0
    %145 = vmatprep.subr.mxu0 0.0
    %146 = vmatpush1.msra.mxu0 0.0
    %147 = vmatprep.subr.mxu0 0.0
    %148 = vmatpush1.msra.mxu0 0.0
    %149 = vmatprep.subr.mxu0 0.0
    %150 = vmatpush1.msra.mxu0 0.0
    %151 = vmatprep.subr.mxu0 0.0
    %152 = vmatpush1.msra.mxu0 0.0
    %153 = vmatprep.subr.mxu0 0.0
    %154 = vmatpush1.msra.mxu0 0.0
    %155 = vmatprep.subr.mxu0 0.0
    %156 = vmatpush1.msra.mxu0 0.0
    %157 = vmatprep.subr.mxu0 0.0
    %158 = vmatpush1.msra.mxu0 0.0
    %159 = vmatprep.subr.mxu0 0.0
    %160 = vmatpush1.msra.mxu0 0.0
    %161 = vmatprep.subr.mxu0 0.0
    %162 = vmatpush1.msra.mxu0 0.0
    %163 = vmatprep.subr.mxu0 0.0
    %164 = vmatpush1.msra.mxu0 0.0
    %165 = vmatprep.subr.mxu0 0.0
    %166 = vmatpush1.msra.mxu0 0.0
    %167 = vmatprep.subr.mxu0 0.0
    %168 = vmatpush1.msra.mxu0 0.0
    %169 = vmatprep.subr.mxu0 0.0
    %170 = vmatpush1.msra.mxu0 0.0
    %171 = vmatprep.subr.mxu0 0.0
    %172 = vmatpush1.msra.mxu0 0.0
    %173 = vmatprep.subr.mxu0 0.0
    %174 = vmatpush1.msra.mxu0 0.0
    %175 = vmatprep.subr.mxu0 0.0
    %176 = vmatpush1.msra.mxu0 0.0
    %177 = vmatprep.subr.mxu0 0.0
    %178 = vmatpush1.msra.mxu0 0.0
    %179 = vmatprep.subr.mxu0 0.0
    %180 = vmatpush1.msra.mxu0 0.0
    %181 = vmatprep.subr.mxu0 0.0
    %182 = vmatpush1.msra.mxu0 0.0
    %183 = vmatprep.subr.mxu0 0.0
    %184 = vmatpush1.msra.mxu0 0.0
    %185 = vmatprep.mubr.f32.mxu0 0.0
    %186 = vmatmul.mubr.f32.gmra.mrb[0].mxu0 %v119
    %v187 = vpop.f32.mrb[0].mxu0
    %v188 = vadd.f32 %v115, %v187
    %v189 = vpop.f32.mrb[0].mxu0
    %190 = vdwg.mxu0
    %v191 = vmul.f32 %v188, 0.5
    %v192 = vtanh.pop %v191
    %v193 = vmul.f32 %v192, 0.5
    %194 = vst.msk [vmem:[#allocation2] sm:$0xff] %vm31, %v193
    // Predicated region
    $region22: #{random_constraints_mlp.1} parent=1 // pred_check
      _
    $region23: #{random_constraints_mlp.1} parent=1 // pred_check_branch
      %196 = sbr.rel (0) target = $region25
    $region24: #{random_constraints_mlp.1} parent=1 // pred_region
      %s198 = ssub.s32 128, 128
      %199 = vsyncadd [#allocation3], %s198
      %s201 = sshll.u32 [#allocation2], 4
      %s202 = int_to_ptr.vmem [resolvable:$true] %s201
      %204 = dma.vmem_to_hbm [thread:$0]  %s202, 128, %s5, [#allocation3]
    $region25: #{random_constraints_mlp.1} parent=1 // pred_fallthru
      _
    // Predicated region
    $region26: #{random_constraints_mlp.1} parent=1 // pred_check
      _
    $region27: #{random_constraints_mlp.1} parent=1 // pred_check_branch
      %206 = sbr.rel (0) target = $region29
    $region28: #{random_constraints_mlp.1} parent=1 // pred_region
      %207 = dma.done [#allocation3], 128
    $region29: #{random_constraints_mlp.1} parent=1 // pred_fallthru
      _
    %208 = vsyncpa [#allocation3], 1

</llo_original>
